<compile_context>
chip_gen: v6e
topology: v6e:2x2x1
jax: 0.10.0
libtpu: 0.0.40
codegen_flags: <defaults>
</compile_context>

<pallas_src>
import jax
import jax.numpy as jnp
from jax.experimental import pallas as pl
from jax.experimental.pallas import tpu as pltpu


def _round_up(v, m):
    return (v + m - 1) // m * m


def _block_spec(block_shape, index_map, *, single_buffer=False):
    """BlockSpec helper: request single-buffering for grid-invariant operands."""
    if single_buffer:
        try:
            return pl.BlockSpec(block_shape, index_map, pipeline_mode=pl.Buffered(1))
        except (TypeError, AttributeError):
            pass  # older jax without pipeline_mode -> default double-buffered spec
    return pl.BlockSpec(block_shape, index_map)


def _vmem_capacity_bytes():
    try:
        return int(pltpu.get_tpu_info().vmem_capacity_bytes)
    except Exception:
        return 64 * 1024 * 1024  # most conservative: v7x per-TensorCore VMEM


def fcuup_kernel(x_ref, w_ref, shift_ref, o_ref):
    # 1x1 Conv1d == per-token matmul on the MXU (f32 accumulation).  The BN
    # scale is pre-folded into the weight columns, so the epilogue is one
    # per-channel add + ReLU on the f32 accumulator.
    y = jnp.dot(x_ref[...], w_ref[...], preferred_element_type=jnp.float32)
    o_ref[...] = jnp.maximum(y + shift_ref[...], 0.0).astype(o_ref.dtype)


def fcu_up_forward(x, conv_w, conv_b, bn_gamma, bn_beta, bn_mean, bn_var, *,
                   L, up_stride, eps=1e-6, token_tile=512,
                   compute_dtype=None, single_buffer_resident=True):
    """FCUUp forward.

    x:        (B, 1+L, C)  patch embeddings with a leading CLS token
    conv_w:   (outC, C)    Conv1d(kernel_size=1) weight (size-1 kernel squeezed)
    conv_b:   (outC,)      Conv1d bias
    bn_*:     (outC,)      BatchNorm1d gamma / beta / running_mean / running_var
    returns:  (B, outC, L * up_stride)
    """
    B, N, C = x.shape
    assert N == L + 1, (N, L)
    outC = conv_w.shape[0]
    if compute_dtype is None:
        compute_dtype = x.dtype        # pass jnp.bfloat16 for the fast MXU path
    out_dtype = x.dtype

    # --- fold conv bias + inference BatchNorm into the weight and a shift -------
    # TODO(synk): training-mode BatchNorm (batch statistics) is not implemented;
    #             this is the inference / running-stats path.
    scale = bn_gamma.astype(jnp.float32) * jax.lax.rsqrt(bn_var.astype(jnp.float32) + eps)
    shift = (conv_b.astype(jnp.float32) - bn_mean.astype(jnp.float32)) * scale \
            + bn_beta.astype(jnp.float32)                                       # (outC,)
    w_t = (conv_w.astype(jnp.float32).T * scale[None, :]).astype(compute_dtype)  # (C, outC)

    # --- layout: drop CLS token, flatten tokens -> (B*L, C) ---------------------
    # (Single wrapper copy; C is consumed at its natural width, block last dim == C.)
    x_tok = x[:, 1:, :].reshape(B * L, C).astype(compute_dtype)
    n_tok = B * L

    # --- pad outC for lane-dense stores only when cheap (<= 25% extra writes) ---
    pad_c = (-outC) % 128
    if pad_c and pad_c * 4 > outC:
        pad_c = 0                      # small outC: masked stores beat 2x writes
    outC_p = outC + pad_c
    if pad_c:
        w_t = jnp.pad(w_t, ((0, 0), (0, pad_c)))
        shift = jnp.pad(shift, (0, pad_c))
    shift_2d = shift.reshape(1, outC_p)

    # --- output-channel tiling: stream weight columns only if it cannot stay
    #     VMEM-resident (important on v7x: 64 MiB physical VMEM per TC) ---------
    itemsize = jnp.dtype(compute_dtype).itemsize
    out_itemsize = jnp.dtype(out_dtype).itemsize
    tn = outC_p
    if itemsize * C * outC_p > (16 << 20):
        for cand in (1024, 512, 256, 128):
            if outC_p % cand == 0:
                tn = cand
                break
    n_out_tiles = max(outC_p // tn, 1)
    weight_resident = (n_out_tiles == 1)

    # --- token tiling: big tiles (HBM roofline), multiple of 8, but keep >= 2
    #     grid steps so both v7x TensorCores get work ----------------------------
    tm = min(_round_up(token_tile, 8), max(_round_up(pl.cdiv(n_tok, 2), 8), 8))

    def vmem_est(tm_):
        w_bufs = 1 if (weight_resident and single_buffer_resident) else 2
        return (2 * tm_ * C * itemsize           # streaming x tiles (double-buffered)
                + w_bufs * C * tn * itemsize     # projection weight
                + 2 * tn * 4                     # folded shift
                + 2 * tm_ * tn * out_itemsize)   # streaming out tiles

    vmem_cap = _vmem_capacity_bytes()
    budget = min(vmem_cap - (16 << 20), int(vmem_cap * 0.85))
    while vmem_est(tm) > budget and tm > 64:
        tm = max(_round_up(tm // 2, 8), 64)

    est = vmem_est(tm)
    vmem_limit = None
    if est > (12 << 20):               # v5e's default scoped VMEM is only 16 MiB
        vmem_limit = min(int(est * 1.25) + (4 << 20), budget)

    grid = (pl.cdiv(n_tok, tm), n_out_tiles)
    flops = 2 * n_tok * C * outC_p
    bytes_accessed = (n_tok * C * itemsize
                      + C * outC_p * itemsize * (1 if weight_resident else grid[0])
                      + 4 * outC_p
                      + n_tok * outC_p * out_itemsize)

    def run(single_buffer):
        resident = weight_resident and single_buffer
        return pl.pallas_call(
            fcuup_kernel,
            out_shape=jax.ShapeDtypeStruct((n_tok, outC_p), out_dtype),
            grid_spec=pltpu.PrefetchScalarGridSpec(
                num_scalar_prefetch=0,
                grid=grid,
                in_specs=[
                    # Activation tiles stream over the (ragged-tail-OK) token axis.
                    pl.BlockSpec((tm, C), lambda i, j: (i, 0)),
                    # Folded weight + shift: VMEM-resident (constant index map)
                    # unless the output-channel axis is tiled; single-buffered
                    # when resident (no re-DMA ever happens for them).
                    _block_spec((C, tn), lambda i, j: (0, j), single_buffer=resident),
                    _block_spec((1, tn), lambda i, j: (0, j), single_buffer=resident),
                ],
                out_specs=pl.BlockSpec((tm, tn), lambda i, j: (i, j)),
            ),
            compiler_params=pltpu.CompilerParams(
                dimension_semantics=("parallel", "parallel"),
                vmem_limit_bytes=vmem_limit,
            ),
            cost_estimate=pl.CostEstimate(
                flops=flops, transcendentals=0, bytes_accessed=bytes_accessed),
        )(x_tok, w_t, shift_2d)

    if weight_resident and single_buffer_resident:
        try:
            y = run(True)
        except Exception:              # pl.Buffered(1) rejected -> default pipeline
            y = run(False)
    else:
        y = run(False)

    # --- unpad (only if padded), then ONE fused transpose + nearest-upsample ----
    if pad_c:
        y = y[:, :outC]
    y = y.reshape(B, L, outC).transpose(0, 2, 1)           # (B, outC, L)
    # Nearest 1-D upsample by an integer factor == interleaved repeat, expressed
    # as broadcast+reshape so XLA fuses transpose + upsample into one copy pass.
    y = jnp.broadcast_to(y[..., None], (B, outC, L, up_stride))
    return y.reshape(B, outC, L * up_stride)


if __name__ == "__main__":
    key = jax.random.PRNGKey(0)
    kx, kw, kb = jax.random.split(key, 3)

    B, L, up_stride = 2, 16, 4
    inplanes, outplanes = 32, 64
    eps = 1e-6

    x = jax.random.normal(kx, (B, L + 1, inplanes), jnp.float32)
    bound = 1.0 / (inplanes ** 0.5)            # nn.Conv1d(k=1) default init bound
    conv_w = jax.random.uniform(kw, (outplanes, inplanes), jnp.float32, -bound, bound)
    conv_b = jax.random.uniform(kb, (outplanes,), jnp.float32, -bound, bound)
    bn_gamma = jnp.ones((outplanes,), jnp.float32)
    bn_beta = jnp.zeros((outplanes,), jnp.float32)
    bn_mean = jnp.zeros((outplanes,), jnp.float32)
    bn_var = jnp.ones((outplanes,), jnp.float32)

    out = fcu_up_forward(x, conv_w, conv_b, bn_gamma, bn_beta, bn_mean, bn_var,
                         L=L, up_stride=up_stride, eps=eps)
    out = jax.block_until_ready(out)

    # Pure-JAX reference of the same math (inference-mode BN, nearest upsample).
    x_r = x[:, 1:, :]                                         # (B, L, C)
    proj = x_r @ conv_w.T + conv_b                            # (B, L, outC)
    bn = (proj - bn_mean) / jnp.sqrt(bn_var + eps) * bn_gamma + bn_beta
    ref = jnp.maximum(bn, 0.0).transpose(0, 2, 1)             # (B, outC, L)
    ref = jnp.repeat(ref, up_stride, axis=-1)                 # (B, outC, L*up)

    assert out.shape == (B, outplanes, L * up_stride), out.shape
    assert jnp.allclose(out, ref, atol=3e-5, rtol=3e-5), \
        float(jnp.max(jnp.abs(out - ref)))

    print("KERNEL_OK")
</pallas_src>

<mosaic_0001>
module attributes {stable_mosaic.version = 11 : i64} {
  func.func @fcuup_kernel(%arg0: i32, %arg1: i32, %arg2: memref<16x32xf32, #tpu.memory_space<vmem>>, %arg3: memref<32x64xf32, #tpu.memory_space<vmem>>, %arg4: memref<1x64xf32, #tpu.memory_space<vmem>>, %arg5: memref<16x64xf32, #tpu.memory_space<vmem>>) attributes {dimension_semantics = [#tpu.dimension_semantics<parallel>, #tpu.dimension_semantics<parallel>], iteration_bounds = array<i64: 2, 1>, scalar_prefetch = 0 : i64, scratch_operands = 0 : i64, tpu.core_type = #tpu.core_type<tc>, window_params = [{transform_indices = @transform_0, window_bounds = array<i64: 16, 32>}, {pipeline_mode = #tpu.pipeline_mode<synchronous>, transform_indices = @transform_1, window_bounds = array<i64: 32, 64>}, {pipeline_mode = #tpu.pipeline_mode<synchronous>, transform_indices = @transform_2, window_bounds = array<i64: 1, 64>}, {transform_indices = @transform_3, window_bounds = array<i64: 16, 64>}]} {
    %c0 = arith.constant 0 : index
    %c0_0 = arith.constant 0 : index
    %0 = vector.load %arg2[%c0, %c0_0] : memref<16x32xf32, #tpu.memory_space<vmem>>, vector<16x32xf32>
    %c0_1 = arith.constant 0 : index
    %c0_2 = arith.constant 0 : index
    %1 = vector.load %arg3[%c0_1, %c0_2] : memref<32x64xf32, #tpu.memory_space<vmem>>, vector<32x64xf32>
    %cst = arith.constant dense<0.000000e+00> : vector<16x64xf32>
    %2 = tpu.matmul %0, %1, %cst {dimension_numbers = #tpu.dot_dimension_numbers<[1], [0], [0], [1], [0, 0, 1, 1], [], []>} : vector<16x32xf32>, vector<32x64xf32>, vector<16x64xf32> -> vector<16x64xf32>
    %c0_3 = arith.constant 0 : index
    %c0_4 = arith.constant 0 : index
    %3 = vector.load %arg4[%c0_3, %c0_4] : memref<1x64xf32, #tpu.memory_space<vmem>>, vector<1x64xf32>
    %4 = vector.broadcast %3 : vector<1x64xf32> to vector<16x64xf32>
    %5 = arith.addf %2, %4 : vector<16x64xf32>
    %cst_5 = arith.constant 0.000000e+00 : f32
    %6 = vector.broadcast %cst_5 : f32 to vector<16x64xf32>
    %7 = arith.maximumf %5, %6 : vector<16x64xf32>
    %c0_6 = arith.constant 0 : index
    %c0_7 = arith.constant 0 : index
    %8 = vector.load %arg5[%c0_6, %c0_7] : memref<16x64xf32, #tpu.memory_space<vmem>>, vector<16x64xf32>
    tpu.vector_store %arg5[%c0_6, %c0_7], %7 {strides = array<i32>} : memref<16x64xf32, #tpu.memory_space<vmem>>, vector<16x64xf32>,
    return
  }
  func.func @transform_0(%arg0: i32, %arg1: i32) -> (i32, i32) {
    %c0_i32 = arith.constant 0 : i32
    %c0_i32_0 = arith.constant 0 : i32
    return %arg0, %c0_i32 : i32, i32
  }
  func.func @transform_1(%arg0: i32, %arg1: i32) -> (i32, i32) {
    %c0_i32 = arith.constant 0 : i32
    %c0_i32_0 = arith.constant 0 : i32
    return %c0_i32, %arg1 : i32, i32
  }
  func.func @transform_2(%arg0: i32, %arg1: i32) -> (i32, i32) {
    %c0_i32 = arith.constant 0 : i32
    %c0_i32_0 = arith.constant 0 : i32
    return %c0_i32, %arg1 : i32, i32
  }
  func.func @transform_3(%arg0: i32, %arg1: i32) -> (i32, i32) {
    %c0_i32 = arith.constant 0 : i32
    return %arg0, %arg1 : i32, i32
  }
}

module attributes {stable_mosaic.version = 11 : i64} {
  func.func @fcuup_kernel(%arg0: i32, %arg1: i32, %arg2: memref<16x32xf32, #tpu.memory_space<vmem>>, %arg3: memref<32x64xf32, #tpu.memory_space<vmem>>, %arg4: memref<1x64xf32, #tpu.memory_space<vmem>>, %arg5: memref<16x64xf32, #tpu.memory_space<vmem>>) attributes {dimension_semantics = [#tpu.dimension_semantics<parallel>, #tpu.dimension_semantics<parallel>], iteration_bounds = array<i64: 2, 1>, scalar_prefetch = 0 : i64, scratch_operands = 0 : i64, tpu.core_type = #tpu.core_type<tc>, window_params = [{transform_indices = @transform_0, window_bounds = array<i64: 16, 32>}, {transform_indices = @transform_1, window_bounds = array<i64: 32, 64>}, {transform_indices = @transform_2, window_bounds = array<i64: 1, 64>}, {transform_indices = @transform_3, window_bounds = array<i64: 16, 64>}]} {
    %c0 = arith.constant 0 : index
    %c0_0 = arith.constant 0 : index
    %0 = vector.load %arg2[%c0, %c0_0] : memref<16x32xf32, #tpu.memory_space<vmem>>, vector<16x32xf32>
    %c0_1 = arith.constant 0 : index
    %c0_2 = arith.constant 0 : index
    %1 = vector.load %arg3[%c0_1, %c0_2] : memref<32x64xf32, #tpu.memory_space<vmem>>, vector<32x64xf32>
    %cst = arith.constant dense<0.000000e+00> : vector<16x64xf32>
    %2 = tpu.matmul %0, %1, %cst {dimension_numbers = #tpu.dot_dimension_numbers<[1], [0], [0], [1], [0, 0, 1, 1], [], []>} : vector<16x32xf32>, vector<32x64xf32>, vector<16x64xf32> -> vector<16x64xf32>
    %c0_3 = arith.constant 0 : index
    %c0_4 = arith.constant 0 : index
    %3 = vector.load %arg4[%c0_3, %c0_4] : memref<1x64xf32, #tpu.memory_space<vmem>>, vector<1x64xf32>
    %4 = vector.broadcast %3 : vector<1x64xf32> to vector<16x64xf32>
    %5 = arith.addf %2, %4 : vector<16x64xf32>
    %cst_5 = arith.constant 0.000000e+00 : f32
    %6 = vector.broadcast %cst_5 : f32 to vector<16x64xf32>
    %7 = arith.maximumf %5, %6 : vector<16x64xf32>
    %c0_6 = arith.constant 0 : index
    %c0_7 = arith.constant 0 : index
    %8 = vector.load %arg5[%c0_6, %c0_7] : memref<16x64xf32, #tpu.memory_space<vmem>>, vector<16x64xf32>
    tpu.vector_store %arg5[%c0_6, %c0_7], %7 {strides = array<i32>} : memref<16x64xf32, #tpu.memory_space<vmem>>, vector<16x64xf32>,
    return
  }
  func.func @transform_0(%arg0: i32, %arg1: i32) -> (i32, i32) {
    %c0_i32 = arith.constant 0 : i32
    %c0_i32_0 = arith.constant 0 : i32
    return %arg0, %c0_i32 : i32, i32
  }
  func.func @transform_1(%arg0: i32, %arg1: i32) -> (i32, i32) {
    %c0_i32 = arith.constant 0 : i32
    %c0_i32_0 = arith.constant 0 : i32
    return %c0_i32, %arg1 : i32, i32
  }
  func.func @transform_2(%arg0: i32, %arg1: i32) -> (i32, i32) {
    %c0_i32 = arith.constant 0 : i32
    %c0_i32_0 = arith.constant 0 : i32
    return %c0_i32, %arg1 : i32, i32
  }
  func.func @transform_3(%arg0: i32, %arg1: i32) -> (i32, i32) {
    %c0_i32 = arith.constant 0 : i32
    return %arg0, %arg1 : i32, i32
  }
}

</mosaic_0001>

<llo_original>
// kernel: tpu_custom_call.1
$region0: #{tpu_custom_call.1}
  #allocation0 [shape = 'u32[]', space=smem, size = 0x4, offset = 0x4, fixed_abs, tag = 'smem constant byte address 0x4 - core index']
  #allocation1 [shape = 'u32[144,128]{1,0:T(1,128)}', space=vmem, size = 0x12000, scoped, tag = 'internal scratch']
  %s0 = inlined_call_operand.hbm [shape: f32[32,32], index: 0, kind: input, shape index: {}]
  %s1 = inlined_call_operand.hbm [shape: f32[32,64], index: 1, kind: input, shape index: {}]
  %s2 = inlined_call_operand.vmem [shape: f32[1,64], index: 2, kind: input, shape index: {}]
  %s3 = inlined_call_operand.hbm [shape: f32[32,64], index: 3, kind: output, shape index: {}]
  %s4 = sld [smem:[#allocation0]]
  $region53: #{tpu_custom_call.1} parent=0
    _
  %s6 = ssub.s32 1, %s4
  %s7 = scalar_select 0, %s6, %s4
  $region1: #{tpu_custom_call.1} parent=0
    #allocation2 [shape = 'u8[16384]{0}', space=vmem, size = 0x4000, scoped, tag = 'input window, operand 0']
    #allocation3 [shape = 's32[2]{0}', space=sflag, size = 0x8, scoped, tag = 'scoped memory for tpu_custom_call.1']
    #allocation4 [shape = 's32[2]{0}', space=sflag, size = 0x8, scoped, tag = 'scoped memory for tpu_custom_call.1']
    #allocation5 [shape = 'u8[16384]{0}', space=vmem, size = 0x4000, scoped, tag = 'input window, operand 1, single buffered']
    #allocation6 [shape = 's32[1]{0}', space=sflag, size = 0x4, scoped, tag = 'scoped memory for tpu_custom_call.1']
    #allocation7 [shape = 'u8[16384]{0}', space=vmem, size = 0x4000, scoped, tag = 'output window, operand 0']
    %8 = vsyncpa [#allocation3], 0
    %s9 = scalar_lea.sflag [#allocation3], 1
    %10 = vsyncpa %s9, 0
    %11 = vsyncpa [#allocation6], 0
    %12 = vsyncpa [#allocation4], 0
    %s13 = scalar_lea.sflag [#allocation4], 1
    %14 = vsyncpa %s13, 0
    loop: start=0, step=1, limit=4
    $region2: #{tpu_custom_call.1} parent=1 // loop_pre_header
      _
    $region3: #{tpu_custom_call.1} parent=1 // loop_header
      %s16 = sphi 0, %s20
      %p17 = scmp.ge.s32.totalorder %s16, 4
      %s23 = sphi 0, %s35
      %s24 = sphi 0, %s31
      %s25 = sphi 0, %s23
      %s26 = sphi 0, %s24
      %s27 = sphi 0, %s25
      %s28 = sphi 0, %s26
      %s38 = sphi 0, %s40
      %s41 = sphi 0, %s38
      %s42 = sphi 0, %s41
      %s58 = sphi 0, %s42
      %s64 = sphi 0, %s66
      %s67 = sphi 0, %s64
      %s68 = sphi 0, %s67
      %s84 = sphi 0, %s68
      %s90 = sphi 0, %s92
      %s93 = sphi 0, %s90
      %s94 = sphi 0, %s93
      %s110 = sphi 0, %s94
      %s118 = sphi 0, %s120
      %s121 = sphi 0, %s118
      %s122 = sphi 0, %s121
      %s138 = sphi 0, %s122
    $region4: #{tpu_custom_call.1} parent=1 // loop_header_branch
      %19 = sbr.rel (%p17) target = $region8
    $region5: #{tpu_custom_call.1} parent=1 // loop_body
      %s21 = ssub.s32 %s16, 1
      %s22 = ssub.s32 %s16, 2
      %s29 = sadd.s32 1, %s24
      %p30 = scmp.ge.s32.totalorder %s29, 1
      %s31 = scalar_select %p30, 0, %s29
      %s32 = sadd.s32 1, %s23
      %s33 = scalar_select %p30, %s32, %s23
      %p34 = scmp.ge.s32.totalorder %s33, 2
      %s35 = scalar_select %p34, 0, %s33
      %s36 = ssub.s32 %s23, %s35
      %p37 = scmp.eq.s32.totalorder %s36, 0
      %s39 = sadd.s32 %s38, 1
      %s40 = scalar_select %p37, %s38, %s39
      %p43 = pneg %p37
      %p44 = scmp.eq.s32.totalorder %s16, 1
      %p45 = por %p43, %p44
      %p46 = scmp.ne.s32.totalorder %s38, %s41
      %p47 = scmp.eq.s32.totalorder %s16, 0
      %p48 = por %p46, %p47
      %p49 = scmp.ne.s32.totalorder %s38, %s41
      %p50 = scmp.eq.s32.totalorder %s21, 1
      %p51 = por %p49, %p50
      %p52 = scmp.ne.s32.totalorder %s41, %s42
      %p53 = scmp.eq.s32.totalorder %s21, 0
      %p54 = por %p52, %p53
      %p55 = scmp.ne.s32.totalorder %s41, %s42
      %p56 = scmp.eq.s32.totalorder %s22, 1
      %p57 = por %p55, %p56
      %p59 = scmp.ne.s32.totalorder %s42, %s58
      %p60 = scmp.eq.s32.totalorder %s22, 0
      %p61 = por %p59, %p60
      %s62 = ssub.s32 %s24, %s31
      %p63 = scmp.eq.s32.totalorder %s62, 0
      %s65 = sadd.s32 %s64, 1
      %s66 = scalar_select %p63, %s64, %s65
      %p69 = pneg %p63
      %p70 = scmp.eq.s32.totalorder %s16, 1
      %p71 = por %p69, %p70
      %p72 = scmp.ne.s32.totalorder %s64, %s67
      %p73 = scmp.eq.s32.totalorder %s16, 0
      %p74 = por %p72, %p73
      %p75 = scmp.ne.s32.totalorder %s64, %s67
      %p76 = scmp.eq.s32.totalorder %s21, 1
      %p77 = por %p75, %p76
      %p78 = scmp.ne.s32.totalorder %s67, %s68
      %p79 = scmp.eq.s32.totalorder %s21, 0
      %p80 = por %p78, %p79
      %p81 = scmp.ne.s32.totalorder %s67, %s68
      %p82 = scmp.eq.s32.totalorder %s22, 1
      %p83 = por %p81, %p82
      %p85 = scmp.ne.s32.totalorder %s68, %s84
      %p86 = scmp.eq.s32.totalorder %s22, 0
      %p87 = por %p85, %p86
      %s88 = ssub.s32 %s24, %s31
      %p89 = scmp.eq.s32.totalorder %s88, 0
      %s91 = sadd.s32 %s90, 1
      %s92 = scalar_select %p89, %s90, %s91
      %p95 = pneg %p89
      %p96 = scmp.eq.s32.totalorder %s16, 1
      %p97 = por %p95, %p96
      %p98 = scmp.ne.s32.totalorder %s90, %s93
      %p99 = scmp.eq.s32.totalorder %s16, 0
      %p100 = por %p98, %p99
      %p101 = scmp.ne.s32.totalorder %s90, %s93
      %p102 = scmp.eq.s32.totalorder %s21, 1
      %p103 = por %p101, %p102
      %p104 = scmp.ne.s32.totalorder %s93, %s94
      %p105 = scmp.eq.s32.totalorder %s21, 0
      %p106 = por %p104, %p105
      %p107 = scmp.ne.s32.totalorder %s93, %s94
      %p108 = scmp.eq.s32.totalorder %s22, 1
      %p109 = por %p107, %p108
      %p111 = scmp.ne.s32.totalorder %s94, %s110
      %p112 = scmp.eq.s32.totalorder %s22, 0
      %p113 = por %p111, %p112
      %s114 = ssub.s32 %s23, %s35
      %s115 = ssub.s32 %s24, %s31
      %s116 = sor.u32 %s114, %s115
      %p117 = scmp.eq.s32.totalorder %s116, 0
      %s119 = sadd.s32 %s118, 1
      %s120 = scalar_select %p117, %s118, %s119
      %p123 = pneg %p117
      %p124 = scmp.eq.s32.totalorder %s16, 1
      %p125 = por %p123, %p124
      %p126 = scmp.ne.s32.totalorder %s118, %s121
      %p127 = scmp.eq.s32.totalorder %s16, 0
      %p128 = por %p126, %p127
      %p129 = scmp.ne.s32.totalorder %s118, %s121
      %p130 = scmp.eq.s32.totalorder %s21, 1
      %p131 = por %p129, %p130
      %p132 = scmp.ne.s32.totalorder %s121, %s122
      %p133 = scmp.eq.s32.totalorder %s21, 0
      %p134 = por %p132, %p133
      %p135 = scmp.ne.s32.totalorder %s121, %s122
      %p136 = scmp.eq.s32.totalorder %s22, 1
      %p137 = por %p135, %p136
      %p139 = scmp.ne.s32.totalorder %s122, %s138
      %p140 = scmp.eq.s32.totalorder %s22, 0
      %p141 = por %p139, %p140
      %p142 = scmp.le.s32.totalorder 1, %s16
      %p143 = scmp.lt.s32.totalorder %s16, 3
      %p144 = pnand %p142, %p143
      %p145 = pneg %p144
      // Predicated region
      $region9: #{tpu_custom_call.1} parent=5 // pred_check
        _
      $region10: #{tpu_custom_call.1} parent=5 // pred_check_branch
        %147 = sbr.rel (%p144) target = $region12
      $region11: #{tpu_custom_call.1} parent=5 // pred_region
        %s148 = ssub.s32 %s16, 1
        // Predicated region
        $region13: #{tpu_custom_call.1} parent=11 // pred_check
          %p149 = pneg %p80
        $region14: #{tpu_custom_call.1} parent=11 // pred_check_branch
          %151 = sbr.rel (%p149) target = $region16
        $region15: #{tpu_custom_call.1} parent=11 // pred_region
          %s153 = ssub.s32 512, 512
          %154 = vsyncadd [#allocation6], %s153
          %s155 = smul.addr %s26, 128
          %s156 = scalar_lea.hbm %s1, %s155
          %s157 = sshll.u32 [#allocation5], 4
          %s158 = int_to_ptr.vmem [resolvable:$true] %s157
          %163 = dma.hbm_to_vmem [thread:$0]  %s156, 512, %s158, [#allocation6], 128, 128, 8
        $region16: #{tpu_custom_call.1} parent=11 // pred_fallthru
          _
        // Predicated region
        $region17: #{tpu_custom_call.1} parent=11 // pred_check
          %p164 = pneg %p106
        $region18: #{tpu_custom_call.1} parent=11 // pred_check_branch
          %166 = sbr.rel (%p164) target = $region20
        $region19: #{tpu_custom_call.1} parent=11 // pred_region
          %p167 = scmp.lt.s32.totalorder %s26, 0
          %s168 = scalar_select %p167, %s26, 0
          %s169 = scalar_lea.vmem %s2, %s168
        $region20: #{tpu_custom_call.1} parent=11 // pred_fallthru
          _
      $region12: #{tpu_custom_call.1} parent=5 // pred_fallthru
        _
      %p170 = scmp.lt.s32.totalorder %s16, 2
      // Predicated region
      $region21: #{tpu_custom_call.1} parent=5 // pred_check
        %p171 = pneg %p170
      $region22: #{tpu_custom_call.1} parent=5 // pred_check_branch
        %173 = sbr.rel (%p171) target = $region24
      $region23: #{tpu_custom_call.1} parent=5 // pred_region
        // Predicated region
        $region25: #{tpu_custom_call.1} parent=23 // pred_check
          %p174 = pneg %p48
        $region26: #{tpu_custom_call.1} parent=23 // pred_check_branch
          %176 = sbr.rel (%p174) target = $region28
        $region27: #{tpu_custom_call.1} parent=23 // pred_region
          %s177 = sand.u32 %s38, 1
          %s178 = scalar_lea.sflag [#allocation3], %s177
          %s179 = sand.u32 %s38, 1
          %s180 = smul.addr %s179, 16
          %s181 = scalar_lea.vmem [#allocation2], %s180
          %s182 = smul.u32 2, %s23
          %s184 = ssub.s32 256, 256
          %185 = vsyncadd %s178, %s184
          %s186 = smul.addr %s182, 128
          %s187 = scalar_lea.hbm %s0, %s186
          %s188 = sshll.u32 %s181, 4
          %s189 = int_to_ptr.vmem [resolvable:$true] %s188
          %194 = dma.hbm_to_vmem [thread:$0]  %s187, 256, %s189, %s178, 128, 128, 8
        $region28: #{tpu_custom_call.1} parent=23 // pred_fallthru
          _
      $region24: #{tpu_custom_call.1} parent=5 // pred_fallthru
        _
      %p195 = scmp.le.s32.totalorder 1, %s16
      %p196 = scmp.lt.s32.totalorder %s16, 3
      %p197 = pnand %p195, %p196
      %p198 = pneg %p197
      // Predicated region
      $region29: #{tpu_custom_call.1} parent=5 // pred_check
        _
      $region30: #{tpu_custom_call.1} parent=5 // pred_check_branch
        %200 = sbr.rel (%p197) target = $region32
      $region31: #{tpu_custom_call.1} parent=5 // pred_region
        %s201 = ssub.s32 %s16, 1
        %s202 = sand.u32 %s41, 1
        %s203 = scalar_lea.sflag [#allocation3], %s202
        %s204 = sand.u32 %s41, 1
        %s205 = smul.addr %s204, 16
        %s206 = scalar_lea.vmem [#allocation2], %s205
        // Predicated region
        $region33: #{tpu_custom_call.1} parent=31 // pred_check
          %p207 = pneg %p54
        $region34: #{tpu_custom_call.1} parent=31 // pred_check_branch
          %209 = sbr.rel (%p207) target = $region36
        $region35: #{tpu_custom_call.1} parent=31 // pred_region
          %210 = dma.done %s203, 256
        $region36: #{tpu_custom_call.1} parent=31 // pred_fallthru
          _
        // Predicated region
        $region37: #{tpu_custom_call.1} parent=31 // pred_check
          %p211 = pneg %p80
        $region38: #{tpu_custom_call.1} parent=31 // pred_check_branch
          %213 = sbr.rel (%p211) target = $region40
        $region39: #{tpu_custom_call.1} parent=31 // pred_region
          %214 = dma.done [#allocation6], 512
        $region40: #{tpu_custom_call.1} parent=31 // pred_fallthru
          _
        %s215 = sand.u32 %s41, 1
        %s216 = scalar_lea.sflag [#allocation3], %s215
        %s217 = sand.u32 %s41, 1
        %s218 = smul.addr %s217, 16
        %s219 = scalar_lea.vmem [#allocation2], %s218
        %p220 = pneg %p54
        %p221 = pneg %p51
        %p222 = pneg %p80
        %p223 = pneg %p77
        %p224 = scmp.lt.s32.totalorder %s26, 0
        %s225 = scalar_select %p224, %s26, 0
        %s226 = scalar_lea.vmem %s2, %s225
        %p227 = pneg %p106
        %p228 = pneg %p103
        %p229 = pneg %p134
        %p230 = pneg %p131
        %s231 = sand.u32 %s121, 1
        %s232 = scalar_lea.sflag [#allocation4], %s231
        %s233 = sand.u32 %s121, 1
        %s234 = smul.addr %s233, 16
        %s235 = scalar_lea.vmem [#allocation7], %s234
        %s236 = smul.u32 2, %s25
        %p237 = scmp.lt.s32.totalorder %s26, 0
        %s238 = scalar_select %p237, %s26, 0
        %s239 = scalar_lea.vmem %s2, %s238
        %s240 = smul.u32 2, %s25
        %v241 = vld [vmem:[%s206] sm:$0xff]
        %v242 = vld [vmem:[%s206 + $0x8] sm:$0xff]
        %v243 = vld [vmem:[#allocation5] sm:$0xff]
        %v244 = vld [vmem:[#allocation5 + $0x8] sm:$0xff]
        %v245 = vld [vmem:[#allocation5 + $0x10] sm:$0xff]
        %v246 = vld [vmem:[#allocation5 + $0x18] sm:$0xff]
        %v247 = vld [vmem:[%s239] sm:$0x1]
        %v249 = vlaneseq
        %v250 = vshrl.u32 %v249, 7
        %v251 = vsub.s32 0, %v250
        %v252 = vrot.slane %v247, %v251
        %vm254 = vcmask 261120
        %v256 = vsel %vm254, %v241, 0
        %v259 = vsel %vm254, %v242, 0
        %261 = vmatprep.subr.mxu0 0.0
        %262 = vmatpush1.msra.mxu0 0.0
        %263 = vmatprep.subr.mxu0 0.0
        %264 = vmatpush1.msra.mxu0 0.0
        %265 = vmatprep.subr.mxu0 0.0
        %266 = vmatpush1.msra.mxu0 0.0
        %267 = vmatprep.subr.mxu0 0.0
        %268 = vmatpush1.msra.mxu0 0.0
        %269 = vmatprep.subr.mxu0 0.0
        %270 = vmatpush1.msra.mxu0 0.0
        %271 = vmatprep.subr.mxu0 0.0
        %272 = vmatpush1.msra.mxu0 0.0
        %273 = vmatprep.subr.mxu0 0.0
        %274 = vmatpush1.msra.mxu0 0.0
        %275 = vmatprep.subr.mxu0 0.0
        %276 = vmatpush1.msra.mxu0 0.0
        %277 = vmatprep.subr.mxu0 0.0
        %278 = vmatpush1.msra.mxu0 0.0
        %279 = vmatprep.subr.mxu0 0.0
        %280 = vmatpush1.msra.mxu0 0.0
        %281 = vmatprep.subr.mxu0 0.0
        %282 = vmatpush1.msra.mxu0 0.0
        %283 = vmatprep.subr.mxu0 0.0
        %284 = vmatpush1.msra.mxu0 0.0
        %285 = vmatprep.subr.mxu0 0.0
        %286 = vmatpush1.msra.mxu0 %v246
        %287 = vmatprep.subr.mxu0 0.0
        %288 = vmatpush1.msra.mxu0 %v245
        %289 = vmatprep.subr.mxu0 0.0
        %290 = vmatpush1.msra.mxu0 %v244
        %291 = vmatprep.subr.mxu0 0.0
        %292 = vmatpush1.msra.mxu0 %v243
        %293 = vmatprep.subr.mxu0 0.0
        %294 = vmatpush2.msra.mxu0 0.0
        %295 = vmatprep.subr.mxu0 0.0
        %296 = vmatpush2.msra.mxu0 0.0
        %297 = vmatprep.subr.mxu0 0.0
        %298 = vmatpush2.msra.mxu0 0.0
        %299 = vmatprep.subr.mxu0 0.0
        %300 = vmatpush2.msra.mxu0 0.0
        %301 = vmatprep.subr.mxu0 0.0
        %302 = vmatpush2.msra.mxu0 0.0
        %303 = vmatprep.subr.mxu0 0.0
        %304 = vmatpush2.msra.mxu0 0.0
        %305 = vmatprep.subr.mxu0 0.0
        %306 = vmatpush2.msra.mxu0 0.0
        %307 = vmatprep.subr.mxu0 0.0
        %308 = vmatpush2.msra.mxu0 0.0
        %309 = vmatprep.subr.mxu0 0.0
        %310 = vmatpush2.msra.mxu0 0.0
        %311 = vmatprep.subr.mxu0 0.0
        %312 = vmatpush2.msra.mxu0 0.0
        %313 = vmatprep.subr.mxu0 0.0
        %314 = vmatpush2.msra.mxu0 0.0
        %315 = vmatprep.subr.mxu0 0.0
        %316 = vmatpush2.msra.mxu0 0.0
        %317 = vmatprep.subr.mxu0 0.0
        %318 = vmatpush2.msra.mxu0 0.0
        %319 = vmatprep.subr.mxu0 0.0
        %320 = vmatpush2.msra.mxu0 0.0
        %321 = vmatprep.subr.mxu0 0.0
        %322 = vmatpush2.msra.mxu0 0.0
        %323 = vmatprep.subr.mxu0 0.0
        %324 = vmatpush2.msra.mxu0 0.0
        %325 = vmatprep.mubr.f32.mxu0 0.0
        %326 = vmatmul.mubr.f32.gmra.mxu0 %v256
        %v327 = vpop.f32.mrf.mxu0
        %v328 = vadd.f32 %v252, %v327
        %v329 = vpop.f32.mrf.mxu0
        %330 = vmatprep.mubr.f32.mxu0 0.0
        %331 = vmatmul.mubr.f32.gmra.mxu0 %v259
        %v332 = vpop.f32.mrf.mxu0
        %v333 = vadd.f32 %v252, %v332
        %v334 = vpop.f32.mrf.mxu0
        %335 = vdwg.mxu0
        %v336 = vmax.f32 %v328, 0.0
        %v337 = vmax.f32 %v333, 0.0
        %vm338 = vcmask 523264
        %339 = vst.msk [vmem:[%s235] sm:$0xff] %vm338, %v336
        %340 = vst.msk [vmem:[%s235 + $0x8] sm:$0xff] %vm338, %v337
        %s341 = sand.u32 %s121, 1
        %s342 = scalar_lea.sflag [#allocation4], %s341
        %s343 = sand.u32 %s121, 1
        %s344 = smul.addr %s343, 16
        %s345 = scalar_lea.vmem [#allocation7], %s344
        // Predicated region
        $region41: #{tpu_custom_call.1} parent=31 // pred_check
          %p346 = pneg %p131
        $region42: #{tpu_custom_call.1} parent=31 // pred_check_branch
          %348 = sbr.rel (%p346) target = $region44
        $region43: #{tpu_custom_call.1} parent=31 // pred_region
          %s349 = smul.u32 2, %s25
          %s351 = ssub.s32 256, 256
          %352 = vsyncadd %s342, %s351
          %s353 = sadd.s32 %s26, %s349
          %s354 = smul.addr %s353, 128
          %s355 = scalar_lea.hbm %s3, %s354
          %s356 = sshll.u32 %s345, 4
          %s357 = int_to_ptr.vmem [resolvable:$true] %s356
          %362 = dma.vmem_to_hbm [thread:$0]  %s357, 256, %s355, %s342, 128, 128, 8
        $region44: #{tpu_custom_call.1} parent=31 // pred_fallthru
          _
      $region32: #{tpu_custom_call.1} parent=5 // pred_fallthru
        _
      %p363 = scmp.le.s32.totalorder 2, %s16
      // Predicated region
      $region45: #{tpu_custom_call.1} parent=5 // pred_check
        %p364 = pneg %p363
      $region46: #{tpu_custom_call.1} parent=5 // pred_check_branch
        %366 = sbr.rel (%p364) target = $region48
      $region47: #{tpu_custom_call.1} parent=5 // pred_region
        %s367 = ssub.s32 %s16, 2
        // Predicated region
        $region49: #{tpu_custom_call.1} parent=47 // pred_check
          %p368 = pneg %p137
        $region50: #{tpu_custom_call.1} parent=47 // pred_check_branch
          %370 = sbr.rel (%p368) target = $region52
        $region51: #{tpu_custom_call.1} parent=47 // pred_region
          %s371 = sand.u32 %s122, 1
          %s372 = scalar_lea.sflag [#allocation4], %s371
          %s373 = sand.u32 %s122, 1
          %s374 = smul.addr %s373, 16
          %s375 = scalar_lea.vmem [#allocation7], %s374
          %376 = dma.done %s372, 256
        $region52: #{tpu_custom_call.1} parent=47 // pred_fallthru
          _
      $region48: #{tpu_custom_call.1} parent=5 // pred_fallthru
        _
    $region6: #{tpu_custom_call.1} parent=1 // loop_footer
      %s20 = sadd.s32 1, %s16
    $region7: #{tpu_custom_call.1} parent=1 // loop_footer_branch
      %15 = sbr.rel target = $region3
    $region8: #{tpu_custom_call.1} parent=1 // loop_exit
      _
    %377 = vsyncpa [#allocation3], 1
    %s378 = scalar_lea.sflag [#allocation3], 1
    %379 = vsyncpa %s378, 1
    %380 = vsyncpa [#allocation6], 1
    %381 = vsyncpa [#allocation4], 1
    %s382 = scalar_lea.sflag [#allocation4], 1
    %383 = vsyncpa %s382, 1

// kernel: tpu_custom_call.1
$region0: #{tpu_custom_call.1}
  #allocation0 [shape = 'u32[]', space=smem, size = 0x4, offset = 0x4, fixed_abs, tag = 'smem constant byte address 0x4 - core index']
  #allocation1 [shape = 'u32[144,128]{1,0:T(1,128)}', space=vmem, size = 0x12000, scoped, tag = 'internal scratch']
  %s0 = inlined_call_operand.hbm [shape: f32[32,32], index: 0, kind: input, shape index: {}]
  %s1 = inlined_call_operand.hbm [shape: f32[32,64], index: 1, kind: input, shape index: {}]
  %s2 = inlined_call_operand.vmem [shape: f32[1,64], index: 2, kind: input, shape index: {}]
  %s3 = inlined_call_operand.hbm [shape: f32[32,64], index: 3, kind: output, shape index: {}]
  %s4 = sld [smem:[#allocation0]]
  $region53: #{tpu_custom_call.1} parent=0
    _
  %s6 = ssub.s32 1, %s4
  %s7 = scalar_select 0, %s6, %s4
  $region1: #{tpu_custom_call.1} parent=0
    #allocation2 [shape = 'u8[16384]{0}', space=vmem, size = 0x4000, scoped, tag = 'input window, operand 0']
    #allocation3 [shape = 's32[2]{0}', space=sflag, size = 0x8, scoped, tag = 'scoped memory for tpu_custom_call.1']
    #allocation4 [shape = 's32[2]{0}', space=sflag, size = 0x8, scoped, tag = 'scoped memory for tpu_custom_call.1']
    #allocation5 [shape = 'u8[16384]{0}', space=vmem, size = 0x4000, scoped, tag = 'input window, operand 1, single buffered']
    #allocation6 [shape = 's32[1]{0}', space=sflag, size = 0x4, scoped, tag = 'scoped memory for tpu_custom_call.1']
    #allocation7 [shape = 'u8[16384]{0}', space=vmem, size = 0x4000, scoped, tag = 'output window, operand 0']
    %8 = vsyncpa [#allocation3], 0
    %s9 = scalar_lea.sflag [#allocation3], 1
    %10 = vsyncpa %s9, 0
    %11 = vsyncpa [#allocation6], 0
    %12 = vsyncpa [#allocation4], 0
    %s13 = scalar_lea.sflag [#allocation4], 1
    %14 = vsyncpa %s13, 0
    loop: start=0, step=1, limit=4
    $region2: #{tpu_custom_call.1} parent=1 // loop_pre_header
      _
    $region3: #{tpu_custom_call.1} parent=1 // loop_header
      %s16 = sphi 0, %s20
      %p17 = scmp.ge.s32.totalorder %s16, 4
      %s23 = sphi 0, %s35
      %s24 = sphi 0, %s31
      %s25 = sphi 0, %s23
      %s26 = sphi 0, %s24
      %s27 = sphi 0, %s25
      %s28 = sphi 0, %s26
      %s38 = sphi 0, %s40
      %s41 = sphi 0, %s38
      %s42 = sphi 0, %s41
      %s58 = sphi 0, %s42
      %s64 = sphi 0, %s66
      %s67 = sphi 0, %s64
      %s68 = sphi 0, %s67
      %s84 = sphi 0, %s68
      %s90 = sphi 0, %s92
      %s93 = sphi 0, %s90
      %s94 = sphi 0, %s93
      %s110 = sphi 0, %s94
      %s118 = sphi 0, %s120
      %s121 = sphi 0, %s118
      %s122 = sphi 0, %s121
      %s138 = sphi 0, %s122
    $region4: #{tpu_custom_call.1} parent=1 // loop_header_branch
      %19 = sbr.rel (%p17) target = $region8
    $region5: #{tpu_custom_call.1} parent=1 // loop_body
      %s21 = ssub.s32 %s16, 1
      %s22 = ssub.s32 %s16, 2
      %s29 = sadd.s32 1, %s24
      %p30 = scmp.ge.s32.totalorder %s29, 1
      %s31 = scalar_select %p30, 0, %s29
      %s32 = sadd.s32 1, %s23
      %s33 = scalar_select %p30, %s32, %s23
      %p34 = scmp.ge.s32.totalorder %s33, 2
      %s35 = scalar_select %p34, 0, %s33
      %s36 = ssub.s32 %s23, %s35
      %p37 = scmp.eq.s32.totalorder %s36, 0
      %s39 = sadd.s32 %s38, 1
      %s40 = scalar_select %p37, %s38, %s39
      %p43 = pneg %p37
      %p44 = scmp.eq.s32.totalorder %s16, 1
      %p45 = por %p43, %p44
      %p46 = scmp.ne.s32.totalorder %s38, %s41
      %p47 = scmp.eq.s32.totalorder %s16, 0
      %p48 = por %p46, %p47
      %p49 = scmp.ne.s32.totalorder %s38, %s41
      %p50 = scmp.eq.s32.totalorder %s21, 1
      %p51 = por %p49, %p50
      %p52 = scmp.ne.s32.totalorder %s41, %s42
      %p53 = scmp.eq.s32.totalorder %s21, 0
      %p54 = por %p52, %p53
      %p55 = scmp.ne.s32.totalorder %s41, %s42
      %p56 = scmp.eq.s32.totalorder %s22, 1
      %p57 = por %p55, %p56
      %p59 = scmp.ne.s32.totalorder %s42, %s58
      %p60 = scmp.eq.s32.totalorder %s22, 0
      %p61 = por %p59, %p60
      %s62 = ssub.s32 %s24, %s31
      %p63 = scmp.eq.s32.totalorder %s62, 0
      %s65 = sadd.s32 %s64, 1
      %s66 = scalar_select %p63, %s64, %s65
      %p69 = pneg %p63
      %p70 = scmp.eq.s32.totalorder %s16, 1
      %p71 = por %p69, %p70
      %p72 = scmp.ne.s32.totalorder %s64, %s67
      %p73 = scmp.eq.s32.totalorder %s16, 0
      %p74 = por %p72, %p73
      %p75 = scmp.ne.s32.totalorder %s64, %s67
      %p76 = scmp.eq.s32.totalorder %s21, 1
      %p77 = por %p75, %p76
      %p78 = scmp.ne.s32.totalorder %s67, %s68
      %p79 = scmp.eq.s32.totalorder %s21, 0
      %p80 = por %p78, %p79
      %p81 = scmp.ne.s32.totalorder %s67, %s68
      %p82 = scmp.eq.s32.totalorder %s22, 1
      %p83 = por %p81, %p82
      %p85 = scmp.ne.s32.totalorder %s68, %s84
      %p86 = scmp.eq.s32.totalorder %s22, 0
      %p87 = por %p85, %p86
      %s88 = ssub.s32 %s24, %s31
      %p89 = scmp.eq.s32.totalorder %s88, 0
      %s91 = sadd.s32 %s90, 1
      %s92 = scalar_select %p89, %s90, %s91
      %p95 = pneg %p89
      %p96 = scmp.eq.s32.totalorder %s16, 1
      %p97 = por %p95, %p96
      %p98 = scmp.ne.s32.totalorder %s90, %s93
      %p99 = scmp.eq.s32.totalorder %s16, 0
      %p100 = por %p98, %p99
      %p101 = scmp.ne.s32.totalorder %s90, %s93
      %p102 = scmp.eq.s32.totalorder %s21, 1
      %p103 = por %p101, %p102
      %p104 = scmp.ne.s32.totalorder %s93, %s94
      %p105 = scmp.eq.s32.totalorder %s21, 0
      %p106 = por %p104, %p105
      %p107 = scmp.ne.s32.totalorder %s93, %s94
      %p108 = scmp.eq.s32.totalorder %s22, 1
      %p109 = por %p107, %p108
      %p111 = scmp.ne.s32.totalorder %s94, %s110
      %p112 = scmp.eq.s32.totalorder %s22, 0
      %p113 = por %p111, %p112
      %s114 = ssub.s32 %s23, %s35
      %s115 = ssub.s32 %s24, %s31
      %s116 = sor.u32 %s114, %s115
      %p117 = scmp.eq.s32.totalorder %s116, 0
      %s119 = sadd.s32 %s118, 1
      %s120 = scalar_select %p117, %s118, %s119
      %p123 = pneg %p117
      %p124 = scmp.eq.s32.totalorder %s16, 1
      %p125 = por %p123, %p124
      %p126 = scmp.ne.s32.totalorder %s118, %s121
      %p127 = scmp.eq.s32.totalorder %s16, 0
      %p128 = por %p126, %p127
      %p129 = scmp.ne.s32.totalorder %s118, %s121
      %p130 = scmp.eq.s32.totalorder %s21, 1
      %p131 = por %p129, %p130
      %p132 = scmp.ne.s32.totalorder %s121, %s122
      %p133 = scmp.eq.s32.totalorder %s21, 0
      %p134 = por %p132, %p133
      %p135 = scmp.ne.s32.totalorder %s121, %s122
      %p136 = scmp.eq.s32.totalorder %s22, 1
      %p137 = por %p135, %p136
      %p139 = scmp.ne.s32.totalorder %s122, %s138
      %p140 = scmp.eq.s32.totalorder %s22, 0
      %p141 = por %p139, %p140
      %p142 = scmp.le.s32.totalorder 1, %s16
      %p143 = scmp.lt.s32.totalorder %s16, 3
      %p144 = pnand %p142, %p143
      %p145 = pneg %p144
      // Predicated region
      $region9: #{tpu_custom_call.1} parent=5 // pred_check
        _
      $region10: #{tpu_custom_call.1} parent=5 // pred_check_branch
        %147 = sbr.rel (%p144) target = $region12
      $region11: #{tpu_custom_call.1} parent=5 // pred_region
        %s148 = ssub.s32 %s16, 1
        // Predicated region
        $region13: #{tpu_custom_call.1} parent=11 // pred_check
          %p149 = pneg %p80
        $region14: #{tpu_custom_call.1} parent=11 // pred_check_branch
          %151 = sbr.rel (%p149) target = $region16
        $region15: #{tpu_custom_call.1} parent=11 // pred_region
          %s153 = ssub.s32 512, 512
          %154 = vsyncadd [#allocation6], %s153
          %s155 = smul.addr %s26, 128
          %s156 = scalar_lea.hbm %s1, %s155
          %s157 = sshll.u32 [#allocation5], 4
          %s158 = int_to_ptr.vmem [resolvable:$true] %s157
          %163 = dma.hbm_to_vmem [thread:$0]  %s156, 512, %s158, [#allocation6], 128, 128, 8
        $region16: #{tpu_custom_call.1} parent=11 // pred_fallthru
          _
        // Predicated region
        $region17: #{tpu_custom_call.1} parent=11 // pred_check
          %p164 = pneg %p106
        $region18: #{tpu_custom_call.1} parent=11 // pred_check_branch
          %166 = sbr.rel (%p164) target = $region20
        $region19: #{tpu_custom_call.1} parent=11 // pred_region
          %p167 = scmp.lt.s32.totalorder %s26, 0
          %s168 = scalar_select %p167, %s26, 0
          %s169 = scalar_lea.vmem %s2, %s168
        $region20: #{tpu_custom_call.1} parent=11 // pred_fallthru
          _
      $region12: #{tpu_custom_call.1} parent=5 // pred_fallthru
        _
      %p170 = scmp.lt.s32.totalorder %s16, 2
      // Predicated region
      $region21: #{tpu_custom_call.1} parent=5 // pred_check
        %p171 = pneg %p170
      $region22: #{tpu_custom_call.1} parent=5 // pred_check_branch
        %173 = sbr.rel (%p171) target = $region24
      $region23: #{tpu_custom_call.1} parent=5 // pred_region
        // Predicated region
        $region25: #{tpu_custom_call.1} parent=23 // pred_check
          %p174 = pneg %p48
        $region26: #{tpu_custom_call.1} parent=23 // pred_check_branch
          %176 = sbr.rel (%p174) target = $region28
        $region27: #{tpu_custom_call.1} parent=23 // pred_region
          %s177 = sand.u32 %s38, 1
          %s178 = scalar_lea.sflag [#allocation3], %s177
          %s179 = sand.u32 %s38, 1
          %s180 = smul.addr %s179, 16
          %s181 = scalar_lea.vmem [#allocation2], %s180
          %s182 = smul.u32 2, %s23
          %s184 = ssub.s32 256, 256
          %185 = vsyncadd %s178, %s184
          %s186 = smul.addr %s182, 128
          %s187 = scalar_lea.hbm %s0, %s186
          %s188 = sshll.u32 %s181, 4
          %s189 = int_to_ptr.vmem [resolvable:$true] %s188
          %194 = dma.hbm_to_vmem [thread:$0]  %s187, 256, %s189, %s178, 128, 128, 8
        $region28: #{tpu_custom_call.1} parent=23 // pred_fallthru
          _
      $region24: #{tpu_custom_call.1} parent=5 // pred_fallthru
        _
      %p195 = scmp.le.s32.totalorder 1, %s16
      %p196 = scmp.lt.s32.totalorder %s16, 3
      %p197 = pnand %p195, %p196
      %p198 = pneg %p197
      // Predicated region
      $region29: #{tpu_custom_call.1} parent=5 // pred_check
        _
      $region30: #{tpu_custom_call.1} parent=5 // pred_check_branch
        %200 = sbr.rel (%p197) target = $region32
      $region31: #{tpu_custom_call.1} parent=5 // pred_region
        %s201 = ssub.s32 %s16, 1
        %s202 = sand.u32 %s41, 1
        %s203 = scalar_lea.sflag [#allocation3], %s202
        %s204 = sand.u32 %s41, 1
        %s205 = smul.addr %s204, 16
        %s206 = scalar_lea.vmem [#allocation2], %s205
        // Predicated region
        $region33: #{tpu_custom_call.1} parent=31 // pred_check
          %p207 = pneg %p54
        $region34: #{tpu_custom_call.1} parent=31 // pred_check_branch
          %209 = sbr.rel (%p207) target = $region36
        $region35: #{tpu_custom_call.1} parent=31 // pred_region
          %210 = dma.done %s203, 256
        $region36: #{tpu_custom_call.1} parent=31 // pred_fallthru
          _
        // Predicated region
        $region37: #{tpu_custom_call.1} parent=31 // pred_check
          %p211 = pneg %p80
        $region38: #{tpu_custom_call.1} parent=31 // pred_check_branch
          %213 = sbr.rel (%p211) target = $region40
        $region39: #{tpu_custom_call.1} parent=31 // pred_region
          %214 = dma.done [#allocation6], 512
        $region40: #{tpu_custom_call.1} parent=31 // pred_fallthru
          _
        %s215 = sand.u32 %s41, 1
        %s216 = scalar_lea.sflag [#allocation3], %s215
        %s217 = sand.u32 %s41, 1
        %s218 = smul.addr %s217, 16
        %s219 = scalar_lea.vmem [#allocation2], %s218
        %p220 = pneg %p54
        %p221 = pneg %p51
        %p222 = pneg %p80
        %p223 = pneg %p77
        %p224 = scmp.lt.s32.totalorder %s26, 0
        %s225 = scalar_select %p224, %s26, 0
        %s226 = scalar_lea.vmem %s2, %s225
        %p227 = pneg %p106
        %p228 = pneg %p103
        %p229 = pneg %p134
        %p230 = pneg %p131
        %s231 = sand.u32 %s121, 1
        %s232 = scalar_lea.sflag [#allocation4], %s231
        %s233 = sand.u32 %s121, 1
        %s234 = smul.addr %s233, 16
        %s235 = scalar_lea.vmem [#allocation7], %s234
        %s236 = smul.u32 2, %s25
        %p237 = scmp.lt.s32.totalorder %s26, 0
        %s238 = scalar_select %p237, %s26, 0
        %s239 = scalar_lea.vmem %s2, %s238
        %s240 = smul.u32 2, %s25
        %v241 = vld [vmem:[%s206] sm:$0xff]
        %v242 = vld [vmem:[%s206 + $0x8] sm:$0xff]
        %v243 = vld [vmem:[#allocation5] sm:$0xff]
        %v244 = vld [vmem:[#allocation5 + $0x8] sm:$0xff]
        %v245 = vld [vmem:[#allocation5 + $0x10] sm:$0xff]
        %v246 = vld [vmem:[#allocation5 + $0x18] sm:$0xff]
        %v247 = vld [vmem:[%s239] sm:$0x1]
        %v249 = vlaneseq
        %v250 = vshrl.u32 %v249, 7
        %v251 = vsub.s32 0, %v250
        %v252 = vrot.slane %v247, %v251
        %vm254 = vcmask 261120
        %v256 = vsel %vm254, %v241, 0
        %v259 = vsel %vm254, %v242, 0
        %261 = vmatprep.subr.mxu0 0.0
        %262 = vmatpush1.msra.mxu0 0.0
        %263 = vmatprep.subr.mxu0 0.0
        %264 = vmatpush1.msra.mxu0 0.0
        %265 = vmatprep.subr.mxu0 0.0
        %266 = vmatpush1.msra.mxu0 0.0
        %267 = vmatprep.subr.mxu0 0.0
        %268 = vmatpush1.msra.mxu0 0.0
        %269 = vmatprep.subr.mxu0 0.0
        %270 = vmatpush1.msra.mxu0 0.0
        %271 = vmatprep.subr.mxu0 0.0
        %272 = vmatpush1.msra.mxu0 0.0
        %273 = vmatprep.subr.mxu0 0.0
        %274 = vmatpush1.msra.mxu0 0.0
        %275 = vmatprep.subr.mxu0 0.0
        %276 = vmatpush1.msra.mxu0 0.0
        %277 = vmatprep.subr.mxu0 0.0
        %278 = vmatpush1.msra.mxu0 0.0
        %279 = vmatprep.subr.mxu0 0.0
        %280 = vmatpush1.msra.mxu0 0.0
        %281 = vmatprep.subr.mxu0 0.0
        %282 = vmatpush1.msra.mxu0 0.0
        %283 = vmatprep.subr.mxu0 0.0
        %284 = vmatpush1.msra.mxu0 0.0
        %285 = vmatprep.subr.mxu0 0.0
        %286 = vmatpush1.msra.mxu0 %v246
        %287 = vmatprep.subr.mxu0 0.0
        %288 = vmatpush1.msra.mxu0 %v245
        %289 = vmatprep.subr.mxu0 0.0
        %290 = vmatpush1.msra.mxu0 %v244
        %291 = vmatprep.subr.mxu0 0.0
        %292 = vmatpush1.msra.mxu0 %v243
        %293 = vmatprep.subr.mxu0 0.0
        %294 = vmatpush2.msra.mxu0 0.0
        %295 = vmatprep.subr.mxu0 0.0
        %296 = vmatpush2.msra.mxu0 0.0
        %297 = vmatprep.subr.mxu0 0.0
        %298 = vmatpush2.msra.mxu0 0.0
        %299 = vmatprep.subr.mxu0 0.0
        %300 = vmatpush2.msra.mxu0 0.0
        %301 = vmatprep.subr.mxu0 0.0
        %302 = vmatpush2.msra.mxu0 0.0
        %303 = vmatprep.subr.mxu0 0.0
        %304 = vmatpush2.msra.mxu0 0.0
        %305 = vmatprep.subr.mxu0 0.0
        %306 = vmatpush2.msra.mxu0 0.0
        %307 = vmatprep.subr.mxu0 0.0
        %308 = vmatpush2.msra.mxu0 0.0
        %309 = vmatprep.subr.mxu0 0.0
        %310 = vmatpush2.msra.mxu0 0.0
        %311 = vmatprep.subr.mxu0 0.0
        %312 = vmatpush2.msra.mxu0 0.0
        %313 = vmatprep.subr.mxu0 0.0
        %314 = vmatpush2.msra.mxu0 0.0
        %315 = vmatprep.subr.mxu0 0.0
        %316 = vmatpush2.msra.mxu0 0.0
        %317 = vmatprep.subr.mxu0 0.0
        %318 = vmatpush2.msra.mxu0 0.0
        %319 = vmatprep.subr.mxu0 0.0
        %320 = vmatpush2.msra.mxu0 0.0
        %321 = vmatprep.subr.mxu0 0.0
        %322 = vmatpush2.msra.mxu0 0.0
        %323 = vmatprep.subr.mxu0 0.0
        %324 = vmatpush2.msra.mxu0 0.0
        %325 = vmatprep.mubr.f32.mxu0 0.0
        %326 = vmatmul.mubr.f32.gmra.mxu0 %v256
        %v327 = vpop.f32.mrf.mxu0
        %v328 = vadd.f32 %v252, %v327
        %v329 = vpop.f32.mrf.mxu0
        %330 = vmatprep.mubr.f32.mxu0 0.0
        %331 = vmatmul.mubr.f32.gmra.mxu0 %v259
        %v332 = vpop.f32.mrf.mxu0
        %v333 = vadd.f32 %v252, %v332
        %v334 = vpop.f32.mrf.mxu0
        %335 = vdwg.mxu0
        %v336 = vmax.f32 %v328, 0.0
        %v337 = vmax.f32 %v333, 0.0
        %vm338 = vcmask 523264
        %339 = vst.msk [vmem:[%s235] sm:$0xff] %vm338, %v336
        %340 = vst.msk [vmem:[%s235 + $0x8] sm:$0xff] %vm338, %v337
        %s341 = sand.u32 %s121, 1
        %s342 = scalar_lea.sflag [#allocation4], %s341
        %s343 = sand.u32 %s121, 1
        %s344 = smul.addr %s343, 16
        %s345 = scalar_lea.vmem [#allocation7], %s344
        // Predicated region
        $region41: #{tpu_custom_call.1} parent=31 // pred_check
          %p346 = pneg %p131
        $region42: #{tpu_custom_call.1} parent=31 // pred_check_branch
          %348 = sbr.rel (%p346) target = $region44
        $region43: #{tpu_custom_call.1} parent=31 // pred_region
          %s349 = smul.u32 2, %s25
          %s351 = ssub.s32 256, 256
          %352 = vsyncadd %s342, %s351
          %s353 = sadd.s32 %s26, %s349
          %s354 = smul.addr %s353, 128
          %s355 = scalar_lea.hbm %s3, %s354
          %s356 = sshll.u32 %s345, 4
          %s357 = int_to_ptr.vmem [resolvable:$true] %s356
          %362 = dma.vmem_to_hbm [thread:$0]  %s357, 256, %s355, %s342, 128, 128, 8
        $region44: #{tpu_custom_call.1} parent=31 // pred_fallthru
          _
      $region32: #{tpu_custom_call.1} parent=5 // pred_fallthru
        _
      %p363 = scmp.le.s32.totalorder 2, %s16
      // Predicated region
      $region45: #{tpu_custom_call.1} parent=5 // pred_check
        %p364 = pneg %p363
      $region46: #{tpu_custom_call.1} parent=5 // pred_check_branch
        %366 = sbr.rel (%p364) target = $region48
      $region47: #{tpu_custom_call.1} parent=5 // pred_region
        %s367 = ssub.s32 %s16, 2
        // Predicated region
        $region49: #{tpu_custom_call.1} parent=47 // pred_check
          %p368 = pneg %p137
        $region50: #{tpu_custom_call.1} parent=47 // pred_check_branch
          %370 = sbr.rel (%p368) target = $region52
        $region51: #{tpu_custom_call.1} parent=47 // pred_region
          %s371 = sand.u32 %s122, 1
          %s372 = scalar_lea.sflag [#allocation4], %s371
          %s373 = sand.u32 %s122, 1
          %s374 = smul.addr %s373, 16
          %s375 = scalar_lea.vmem [#allocation7], %s374
          %376 = dma.done %s372, 256
        $region52: #{tpu_custom_call.1} parent=47 // pred_fallthru
          _
      $region48: #{tpu_custom_call.1} parent=5 // pred_fallthru
        _
    $region6: #{tpu_custom_call.1} parent=1 // loop_footer
      %s20 = sadd.s32 1, %s16
    $region7: #{tpu_custom_call.1} parent=1 // loop_footer_branch
      %15 = sbr.rel target = $region3
    $region8: #{tpu_custom_call.1} parent=1 // loop_exit
      _
    %377 = vsyncpa [#allocation3], 1
    %s378 = scalar_lea.sflag [#allocation3], 1
    %379 = vsyncpa %s378, 1
    %380 = vsyncpa [#allocation6], 1
    %381 = vsyncpa [#allocation4], 1
    %s382 = scalar_lea.sflag [#allocation4], 1
    %383 = vsyncpa %s382, 1

</llo_original>
